<compile_context>
chip_gen: v7x
topology: tpu7x:2x2x1
jax: 0.10.0
libtpu: 0.0.40
codegen_flags: <defaults>
</compile_context>

<pallas_src>
import functools

import jax
import jax.numpy as jnp
from jax import lax
from jax.experimental import pallas as pl
from jax.experimental.pallas import tpu as pltpu

# Module hyper-parameters (from __init__ defaults).
ALPHA1 = 0.8
ALPHA2 = 0.2
MARGIN = 2.0
LAMBDA_REG = 0.1
PAIR_EPS = 1e-6            # eps of torch.nn.functional.pairwise_distance
CDIST_EPS = 1e-6           # clamp floor in _compute_typicality
CDIST_EPS_SQ = CDIST_EPS * CDIST_EPS

_LANE = 128
_SUBLANE = 8
_MAX_BLOCK_ROWS = 256      # row-block size for the N^2 typicality passes


def _round_up(x, m):
    return ((x + m - 1) // m) * m


def _mosaic_params(semantics, est_bytes):
    # Size the scoped-VMEM request from the residency estimate; never go below
    # the 32 MiB default and stay well under v7x's 64 MiB physical VMEM.
    limit = int(min(max(est_bytes, 32 * 2**20), 56 * 2**20))
    return pltpu.CompilerParams(dimension_semantics=semantics,
                                vmem_limit_bytes=limit)


def _d2_block(xq, xk, r_row):
    """Squared distances between a bf16 row block (TB,D) and the full set (N,D).

    d2[i,j] = ||xq_i||^2 + ||xk_j||^2 - 2<xq_i, xk_j>.  The Gram term contracts
    the trailing dim of BOTH operands (q @ k^T form -> no XLU transpose), runs
    bf16 on the MXU with f32 accumulation, and the LHS is pre-scaled by 2
    (exact for bf16) so the (TB,N) product needs no extra elementwise multiply.
    """
    two = jnp.asarray(2.0, dtype=xq.dtype)
    gram2 = lax.dot_general(xq * two, xk,
                            dimension_numbers=(((1,), (1,)), ((), ())),
                            preferred_element_type=jnp.float32)       # (TB, N)
    xq32 = xq.astype(jnp.float32)
    r_col = jnp.sum(xq32 * xq32, axis=-1, keepdims=True)              # (TB, 1)
    return (r_col + r_row) - gram2                                    # (TB, N)


# --------------------------------------------------------------------------
# Kernel 1: triplet margin loss (cheap O(N*D), row-block grid + accumulator).
# --------------------------------------------------------------------------
def _triplet_kernel(a_ref, p_ref, n_ref, loss_ref, *, n_rows, block_rows):
    b = pl.program_id(0)

    @pl.when(b == 0)
    def _init():
        loss_ref[...] = jnp.zeros_like(loss_ref)

    a = a_ref[...].astype(jnp.float32)
    p = p_ref[...].astype(jnp.float32)
    n = n_ref[...].astype(jnp.float32)
    dp = a - p + PAIR_EPS
    dn = a - n + PAIR_EPS
    d_ap = jnp.sqrt(jnp.sum(dp * dp, axis=-1, keepdims=True))
    d_an = jnp.sqrt(jnp.sum(dn * dn, axis=-1, keepdims=True))
    hinge = jnp.maximum(d_ap - d_an + MARGIN, 0.0)                    # (TB, 1)
    rows = b * block_rows + lax.broadcasted_iota(jnp.int32, hinge.shape, 0)
    hinge = jnp.where(rows < n_rows, hinge, 0.0)                      # mask padding
    loss_ref[...] += jnp.sum(hinge) * (1.0 / n_rows)


# --------------------------------------------------------------------------
# Kernel 2: typicality pass 1 -- global max of pairwise squared distances.
# --------------------------------------------------------------------------
def _max_d2_kernel(xblk_ref, xfull_ref, rsq_ref, maxsq_ref, *, n_rows, block_rows):
    b = pl.program_id(0)

    @pl.when(b == 0)
    def _init():
        maxsq_ref[...] = jnp.zeros_like(maxsq_ref)

    d2 = _d2_block(xblk_ref[...], xfull_ref[...], rsq_ref[...])
    # Mask rows of a partial last block so uninitialised VMEM cannot pollute the max.
    rows = b * block_rows + lax.broadcasted_iota(jnp.int32, (block_rows, 1), 0)
    d2 = jnp.where(rows < n_rows, d2, 0.0)
    maxsq_ref[...] = jnp.maximum(maxsq_ref[...], jnp.max(d2))


# --------------------------------------------------------------------------
# Kernel 3: typicality pass 2 -- kernel density + sigmoid (parallel row blocks).
# --------------------------------------------------------------------------
def _density_kernel(params_ref, xblk_ref, xfull_ref, rsq_ref, typ_ref, *, n_rows):
    c = params_ref[0]        # -beta / max(1, max_pairwise_dist)  (folded scalar)
    gamma = params_ref[1]
    d2 = _d2_block(xblk_ref[...], xfull_ref[...], rsq_ref[...])
    d2 = jnp.maximum(d2, CDIST_EPS_SQ)       # torch.clamp(dist, min=1e-6) on dist^2
    ker = jnp.exp(c * d2)                                             # (TB, N) EUP
    density = jnp.sum(ker, axis=-1, keepdims=True) * (1.0 / n_rows)   # (TB, 1)
    # sigmoid(gamma * density); exact divide (only O(N) elements total).
    typ_ref[...] = 1.0 / (1.0 + jnp.exp(-gamma * density))


# --------------------------------------------------------------------------
# Wrappers
# --------------------------------------------------------------------------
def _typicality_inputs(x):
    """bf16, lane-padded copy of x plus its (1, N) squared row norms (f32)."""
    _, d = x.shape
    xb = x.astype(jnp.bfloat16)
    d_pad = _round_up(d, _LANE)
    if d_pad != d:
        xb = jnp.pad(xb, ((0, 0), (0, d_pad - d)))
    # Norms from the *same* bf16 values -> consistent with the bf16 Gram matmul.
    rsq = jnp.sum(jnp.square(xb.astype(jnp.float32)), axis=-1)[None, :]
    return xb, rsq


def _typicality(x, beta, gamma):
    """sigmoid(gamma * mean_j exp(-beta * d_ij^2 / max(1, max_dist))), shape (N,)."""
    n, _ = x.shape
    xb, rsq = _typicality_inputs(x)
    d_pad = xb.shape[1]
    tb = n if n <= _MAX_BLOCK_ROWS else _MAX_BLOCK_ROWS
    nb = pl.cdiv(n, tb)

    x_blk_spec = pl.BlockSpec((tb, d_pad), lambda b: (b, 0))
    x_full_spec = pl.BlockSpec((n, d_pad), lambda b: (0, 0))    # resident, one DMA
    rsq_spec = pl.BlockSpec((1, n), lambda b: (0, 0))

    # Residency: double-buffered inputs + a few (TB, N) f32 temporaries + slack.
    est = (2 * n * d_pad * 2 + 2 * tb * d_pad * 2 + 2 * n * 4
           + 6 * tb * n * 4 + (4 << 20))

    # Pass 1: global max of d2 (sequential accumulation into a resident (1,1)).
    maxsq = pl.pallas_call(
        functools.partial(_max_d2_kernel, n_rows=n, block_rows=tb),
        grid=(nb,),
        in_specs=[x_blk_spec, x_full_spec, rsq_spec],
        out_specs=pl.BlockSpec((1, 1), lambda b: (0, 0)),
        out_shape=jax.ShapeDtypeStruct((1, 1), jnp.float32),
        compiler_params=_mosaic_params(("arbitrary",), est),
    )(xb, xb, rsq)

    # Fold every scalar out of the N^2 stream: exp(-beta*d2/denom) == exp(c*d2).
    denom = jnp.maximum(1.0, jnp.sqrt(maxsq[0, 0]))
    params = jnp.stack([-beta / denom, gamma]).astype(jnp.float32)

    # Pass 2: densities + sigmoid.  Row blocks are independent -> "parallel"
    # (megacore-sharded on v7x; harmless elsewhere).
    typ = pl.pallas_call(
        functools.partial(_density_kernel, n_rows=n),
        grid=(nb,),
        in_specs=[pl.BlockSpec(memory_space=pltpu.MemorySpace.SMEM),
                  x_blk_spec, x_full_spec, rsq_spec],
        out_specs=pl.BlockSpec((tb, 1), lambda b: (b, 0)),
        out_shape=jax.ShapeDtypeStruct((n, 1), jnp.float32),
        compiler_params=_mosaic_params(("parallel",), est),
    )(params, xb, xb, rsq)
    return typ[:, 0]


def _triplet_margin_loss(anchor, pos, neg):
    n, d = anchor.shape
    tb = n if n <= _MAX_BLOCK_ROWS else _MAX_BLOCK_ROWS
    nb = pl.cdiv(n, tb)
    spec = pl.BlockSpec((tb, d), lambda b: (b, 0))
    est = 3 * 2 * tb * d * 4 + (4 << 20)
    out = pl.pallas_call(
        functools.partial(_triplet_kernel, n_rows=n, block_rows=tb),
        grid=(nb,),
        in_specs=[spec, spec, spec],
        out_specs=pl.BlockSpec((1, 1), lambda b: (0, 0)),
        out_shape=jax.ShapeDtypeStruct((1, 1), jnp.float32),
        compiler_params=_mosaic_params(("arbitrary",), est),
    )(anchor, pos, neg)
    return out[0, 0]


@functools.partial(jax.jit, static_argnames=("has_inlier",))
def my_loss_imp(embed_anchor, embed_pos, embed_neg, beta, gamma, has_inlier=False):
    """Returns (total_loss, typ_diff.mean()) exactly like the PyTorch forward."""
    beta = jnp.asarray(beta, jnp.float32)
    gamma = jnp.asarray(gamma, jnp.float32)

    loss_tml = _triplet_margin_loss(embed_anchor, embed_pos, embed_neg)
    typ_anchor = _typicality(embed_anchor, beta, gamma)
    typ_neg = _typicality(embed_neg, beta, gamma)
    typ_diff_mean = jnp.mean(jnp.abs(typ_neg - typ_anchor))

    total = ALPHA1 * loss_tml + ALPHA2 * typ_diff_mean
    if has_inlier:
        # NB: the PyTorch module derives the "inlier" regulariser from embed_pos
        # (even though inlier_embeddings gates it) -- reproduced verbatim.
        typ_pos = _typicality(embed_pos, beta, gamma)
        total = total + LAMBDA_REG * jnp.mean(1.0 - typ_pos)
    return total, typ_diff_mean


def _ref_loss(a, p, n, beta, gamma, has_inlier=False):
    """Pure-JAX f32 reference mirroring the PyTorch semantics (for checking)."""
    def typ(x):
        d2 = jnp.sum((x[:, None, :] - x[None, :, :]) ** 2, axis=-1)
        d = jnp.maximum(jnp.sqrt(jnp.maximum(d2, 0.0)), CDIST_EPS)
        mx = jnp.maximum(1.0, jnp.max(d))
        dens = jnp.mean(jnp.exp(-beta * d * d / mx), axis=1)
        return jax.nn.sigmoid(gamma * dens)

    d_ap = jnp.linalg.norm(a - p + PAIR_EPS, axis=-1)
    d_an = jnp.linalg.norm(a - n + PAIR_EPS, axis=-1)
    loss_tml = jnp.mean(jnp.maximum(d_ap - d_an + MARGIN, 0.0))
    t_neg, t_anc = typ(n), typ(a)
    typ_diff = jnp.abs(t_neg - t_anc)
    total = ALPHA1 * loss_tml + ALPHA2 * jnp.mean(typ_diff)
    if has_inlier:
        total = total + LAMBDA_REG * jnp.mean(1.0 - typ(p))
    return total, jnp.mean(typ_diff)


if __name__ == "__main__":
    key = jax.random.PRNGKey(0)
    ka, kp, kn = jax.random.split(key, 3)
    N, D = 8, 32  # small (batch, feature) shapes

    embed_anchor = jax.random.normal(ka, (N, D), dtype=jnp.float32)
    embed_pos = embed_anchor + 0.1 * jax.random.normal(kp, (N, D), dtype=jnp.float32)
    embed_neg = jax.random.normal(kn, (N, D), dtype=jnp.float32) + 1.0

    # Deterministic parameter init (matches the nn.Parameter defaults).
    typicality_beta = jnp.float32(1.0)
    typicality_gamma = jnp.float32(0.5)

    # has_inlier=False path (pos-typicality statically skipped).
    total, typd = my_loss_imp(embed_anchor, embed_pos, embed_neg,
                              typicality_beta, typicality_gamma, has_inlier=False)
    jax.block_until_ready((total, typd))
    ref_total, ref_typd = _ref_loss(embed_anchor, embed_pos, embed_neg,
                                    typicality_beta, typicality_gamma, False)
    assert abs(float(total) - float(ref_total)) < 1e-3, (total, ref_total)
    assert abs(float(typd) - float(ref_typd)) < 1e-3, (typd, ref_typd)

    # has_inlier=True path (inlier regularizer active).
    total_i, typd_i = my_loss_imp(embed_anchor, embed_pos, embed_neg,
                                  typicality_beta, typicality_gamma, has_inlier=True)
    jax.block_until_ready((total_i, typd_i))
    ref_total_i, ref_typd_i = _ref_loss(embed_anchor, embed_pos, embed_neg,
                                        typicality_beta, typicality_gamma, True)
    assert abs(float(total_i) - float(ref_total_i)) < 1e-3, (total_i, ref_total_i)
    assert abs(float(typd_i) - float(ref_typd_i)) < 1e-3, (typd_i, ref_typd_i)

    print("KERNEL_OK")
</pallas_src>

<mosaic_0001>
module attributes {stable_mosaic.version = 11 : i64} {
  func.func @_max_d2_kernel(%arg0: i32, %arg1: memref<8x128xbf16, #tpu.memory_space<vmem>>, %arg2: memref<8x128xbf16, #tpu.memory_space<vmem>>, %arg3: memref<1x8xf32, #tpu.memory_space<vmem>>, %arg4: memref<1x1xf32, #tpu.memory_space<vmem>>) attributes {dimension_semantics = [#tpu.dimension_semantics<arbitrary>], iteration_bounds = array<i64: 1>, scalar_prefetch = 0 : i64, scratch_operands = 0 : i64, tpu.core_type = #tpu.core_type<tc>, window_params = [{transform_indices = @transform_0, window_bounds = array<i64: 8, 128>}, {pipeline_mode = #tpu.pipeline_mode<synchronous>, transform_indices = @transform_1, window_bounds = array<i64: 8, 128>}, {pipeline_mode = #tpu.pipeline_mode<synchronous>, transform_indices = @transform_2, window_bounds = array<i64: 1, 8>}, {pipeline_mode = #tpu.pipeline_mode<synchronous>, transform_indices = @transform_3, window_bounds = array<i64: 1, 1>}]} {
    %c0_i32 = arith.constant 0 : i32
    %0 = arith.cmpi eq, %arg0, %c0_i32 : i32
    %1 = arith.extui %0 : i1 to i32
    %c0_i32_0 = arith.constant 0 : i32
    %2 = arith.cmpi ne, %1, %c0_i32_0 : i32
    scf.if %2 {
      %cst_15 = arith.constant 0.000000e+00 : f32
      %35 = vector.broadcast %cst_15 : f32 to vector<1x1xf32>
      %c0_16 = arith.constant 0 : index
      %c0_17 = arith.constant 0 : index
      %36 = vector.load %arg4[%c0_16, %c0_17] : memref<1x1xf32, #tpu.memory_space<vmem>>, vector<1x1xf32>
      tpu.vector_store %arg4[%c0_16, %c0_17], %35 {strides = array<i32>} : memref<1x1xf32, #tpu.memory_space<vmem>>, vector<1x1xf32>,
    } else {
    }
    %c0 = arith.constant 0 : index
    %c0_1 = arith.constant 0 : index
    %3 = vector.load %arg1[%c0, %c0_1] : memref<8x128xbf16, #tpu.memory_space<vmem>>, vector<8x128xbf16>
    %c0_2 = arith.constant 0 : index
    %c0_3 = arith.constant 0 : index
    %4 = vector.load %arg2[%c0_2, %c0_3] : memref<8x128xbf16, #tpu.memory_space<vmem>>, vector<8x128xbf16>
    %c0_4 = arith.constant 0 : index
    %c0_5 = arith.constant 0 : index
    %5 = vector.load %arg3[%c0_4, %c0_5] : memref<1x8xf32, #tpu.memory_space<vmem>>, vector<1x8xf32>
    %cst = arith.constant 2.000000e+00 : bf16
    %6 = vector.broadcast %cst : bf16 to vector<8x128xbf16>
    %7 = arith.mulf %3, %6 : vector<8x128xbf16>
    %cst_6 = arith.constant dense<0.000000e+00> : vector<8x8xf32>
    %8 = tpu.matmul %7, %4, %cst_6 {dimension_numbers = #tpu.dot_dimension_numbers<[1], [1], [0], [0], [0, 0, 1, 0], [], []>} : vector<8x128xbf16>, vector<8x128xbf16>, vector<8x8xf32> -> vector<8x8xf32>
    %9 = arith.extf %3 : vector<8x128xbf16> to vector<8x128xf32>
    %10 = arith.mulf %9, %9 : vector<8x128xf32>
    %cst_7 = arith.constant dense<0.000000e+00> : vector<8xf32>
    %11 = vector.multi_reduction <add>, %10, %cst_7 [1] : vector<8x128xf32> to vector<8xf32>
    %12 = vector.shape_cast %11 : vector<8xf32> to vector<8x1xf32>
    %13 = vector.broadcast %12 : vector<8x1xf32> to vector<8x8xf32>
    %14 = vector.broadcast %5 : vector<1x8xf32> to vector<8x8xf32>
    %15 = arith.addf %13, %14 : vector<8x8xf32>
    %16 = arith.subf %15, %8 : vector<8x8xf32>
    %c8_i32 = arith.constant 8 : i32
    %17 = arith.muli %arg0, %c8_i32 : i32
    %18 = tpu.iota {dimensions = array<i32: 0>} : vector<8x1xi32>
    %19 = vector.broadcast %17 : i32 to vector<8x1xi32>
    %20 = arith.addi %19, %18 : vector<8x1xi32>
    %c8_i32_8 = arith.constant 8 : i32
    %21 = vector.broadcast %c8_i32_8 : i32 to vector<8x1xi32>
    %22 = arith.cmpi slt, %20, %21 : vector<8x1xi32>
    %cst_9 = arith.constant 0.000000e+00 : f32
    %23 = vector.shape_cast %22 : vector<8x1xi1> to vector<8x1xi1>
    %24 = vector.broadcast %23 : vector<8x1xi1> to vector<8x8xi1>
    %25 = vector.broadcast %cst_9 : f32 to vector<8x8xf32>
    %26 = arith.select %24, %16, %25 : vector<8x8xi1>, vector<8x8xf32>
    %c0_10 = arith.constant 0 : index
    %c0_11 = arith.constant 0 : index
    %27 = vector.load %arg4[%c0_10, %c0_11] : memref<1x1xf32, #tpu.memory_space<vmem>>, vector<1x1xf32>
    %28 = vector.shape_cast %26 : vector<8x8xf32> to vector<1x8x8xf32>
    %cst_12 = arith.constant dense<0xFF800000> : vector<1xf32>
    %29 = vector.multi_reduction <maximumf>, %28, %cst_12 [1, 2] : vector<1x8x8xf32> to vector<1xf32>
    %30 = vector.shape_cast %29 : vector<1xf32> to vector<1x1x1xf32>
    %31 = vector.extract %30[0, 0, 0] : f32 from vector<1x1x1xf32>
    %32 = vector.broadcast %31 : f32 to vector<1x1xf32>
    %33 = arith.maximumf %27, %32 : vector<1x1xf32>
    %c0_13 = arith.constant 0 : index
    %c0_14 = arith.constant 0 : index
    %34 = vector.load %arg4[%c0_13, %c0_14] : memref<1x1xf32, #tpu.memory_space<vmem>>, vector<1x1xf32>
    tpu.vector_store %arg4[%c0_13, %c0_14], %33 {strides = array<i32>} : memref<1x1xf32, #tpu.memory_space<vmem>>, vector<1x1xf32>,
    return
  }
  func.func @transform_0(%arg0: i32) -> (i32, i32) {
    %c0_i32 = arith.constant 0 : i32
    %c0_i32_0 = arith.constant 0 : i32
    return %arg0, %c0_i32 : i32, i32
  }
  func.func @transform_1(%arg0: i32) -> (i32, i32) {
    %c0_i32 = arith.constant 0 : i32
    %c0_i32_0 = arith.constant 0 : i32
    %c0_i32_1 = arith.constant 0 : i32
    return %c0_i32, %c0_i32_0 : i32, i32
  }
  func.func @transform_2(%arg0: i32) -> (i32, i32) {
    %c0_i32 = arith.constant 0 : i32
    %c0_i32_0 = arith.constant 0 : i32
    %c0_i32_1 = arith.constant 0 : i32
    return %c0_i32, %c0_i32_0 : i32, i32
  }
  func.func @transform_3(%arg0: i32) -> (i32, i32) {
    %c0_i32 = arith.constant 0 : i32
    %c0_i32_0 = arith.constant 0 : i32
    %c0_i32_1 = arith.constant 0 : i32
    return %c0_i32, %c0_i32_0 : i32, i32
  }
}

module attributes {stable_mosaic.version = 11 : i64} {
  func.func @_density_kernel(%arg0: i32, %arg1: memref<2xf32, #tpu.memory_space<smem>>, %arg2: memref<8x128xbf16, #tpu.memory_space<vmem>>, %arg3: memref<8x128xbf16, #tpu.memory_space<vmem>>, %arg4: memref<1x8xf32, #tpu.memory_space<vmem>>, %arg5: memref<8x1xf32, #tpu.memory_space<vmem>>) attributes {dimension_semantics = [#tpu.dimension_semantics<parallel>], iteration_bounds = array<i64: 1>, scalar_prefetch = 0 : i64, scratch_operands = 0 : i64, tpu.core_type = #tpu.core_type<tc>, window_params = [{transform_indices = @transform_0, window_bounds = array<i64: 2>}, {transform_indices = @transform_1, window_bounds = array<i64: 8, 128>}, {pipeline_mode = #tpu.pipeline_mode<synchronous>, transform_indices = @transform_2, window_bounds = array<i64: 8, 128>}, {pipeline_mode = #tpu.pipeline_mode<synchronous>, transform_indices = @transform_3, window_bounds = array<i64: 1, 8>}, {transform_indices = @transform_4, window_bounds = array<i64: 8, 1>}]} {
    %c0 = arith.constant 0 : index
    %0 = memref.load %arg1[%c0] : memref<2xf32, #tpu.memory_space<smem>>
    %c1 = arith.constant 1 : index
    %1 = memref.load %arg1[%c1] : memref<2xf32, #tpu.memory_space<smem>>
    %c0_0 = arith.constant 0 : index
    %c0_1 = arith.constant 0 : index
    %2 = vector.load %arg2[%c0_0, %c0_1] : memref<8x128xbf16, #tpu.memory_space<vmem>>, vector<8x128xbf16>
    %c0_2 = arith.constant 0 : index
    %c0_3 = arith.constant 0 : index
    %3 = vector.load %arg3[%c0_2, %c0_3] : memref<8x128xbf16, #tpu.memory_space<vmem>>, vector<8x128xbf16>
    %c0_4 = arith.constant 0 : index
    %c0_5 = arith.constant 0 : index
    %4 = vector.load %arg4[%c0_4, %c0_5] : memref<1x8xf32, #tpu.memory_space<vmem>>, vector<1x8xf32>
    %cst = arith.constant 2.000000e+00 : bf16
    %5 = vector.broadcast %cst : bf16 to vector<8x128xbf16>
    %6 = arith.mulf %2, %5 : vector<8x128xbf16>
    %cst_6 = arith.constant dense<0.000000e+00> : vector<8x8xf32>
    %7 = tpu.matmul %6, %3, %cst_6 {dimension_numbers = #tpu.dot_dimension_numbers<[1], [1], [0], [0], [0, 0, 1, 0], [], []>} : vector<8x128xbf16>, vector<8x128xbf16>, vector<8x8xf32> -> vector<8x8xf32>
    %8 = arith.extf %2 : vector<8x128xbf16> to vector<8x128xf32>
    %9 = arith.mulf %8, %8 : vector<8x128xf32>
    %cst_7 = arith.constant dense<0.000000e+00> : vector<8xf32>
    %10 = vector.multi_reduction <add>, %9, %cst_7 [1] : vector<8x128xf32> to vector<8xf32>
    %11 = vector.shape_cast %10 : vector<8xf32> to vector<8x1xf32>
    %12 = vector.broadcast %11 : vector<8x1xf32> to vector<8x8xf32>
    %13 = vector.broadcast %4 : vector<1x8xf32> to vector<8x8xf32>
    %14 = arith.addf %12, %13 : vector<8x8xf32>
    %15 = arith.subf %14, %7 : vector<8x8xf32>
    %cst_8 = arith.constant 9.99999996E-13 : f32
    %16 = vector.broadcast %cst_8 : f32 to vector<8x8xf32>
    %17 = arith.maximumf %15, %16 : vector<8x8xf32>
    %18 = vector.broadcast %0 : f32 to vector<8x8xf32>
    %19 = arith.mulf %18, %17 : vector<8x8xf32>
    %20 = math.exp %19 : vector<8x8xf32>
    %cst_9 = arith.constant dense<0.000000e+00> : vector<8xf32>
    %21 = vector.multi_reduction <add>, %20, %cst_9 [1] : vector<8x8xf32> to vector<8xf32>
    %22 = vector.shape_cast %21 : vector<8xf32> to vector<8x1xf32>
    %cst_10 = arith.constant 1.250000e-01 : f32
    %23 = vector.broadcast %cst_10 : f32 to vector<8x1xf32>
    %24 = arith.mulf %22, %23 : vector<8x1xf32>
    %cst_11 = arith.constant 0.000000e+00 : f32
    %25 = arith.subf %cst_11, %1 : f32
    %26 = vector.broadcast %25 : f32 to vector<8x1xf32>
    %27 = arith.mulf %26, %24 : vector<8x1xf32>
    %28 = math.exp %27 : vector<8x1xf32>
    %cst_12 = arith.constant 1.000000e+00 : f32
    %29 = vector.broadcast %cst_12 : f32 to vector<8x1xf32>
    %30 = arith.addf %29, %28 : vector<8x1xf32>
    %cst_13 = arith.constant 1.000000e+00 : f32
    %31 = vector.broadcast %cst_13 : f32 to vector<8x1xf32>
    %32 = arith.divf %31, %30 : vector<8x1xf32>
    %c0_14 = arith.constant 0 : index
    %c0_15 = arith.constant 0 : index
    %33 = vector.load %arg5[%c0_14, %c0_15] : memref<8x1xf32, #tpu.memory_space<vmem>>, vector<8x1xf32>
    tpu.vector_store %arg5[%c0_14, %c0_15], %32 {strides = array<i32>} : memref<8x1xf32, #tpu.memory_space<vmem>>, vector<8x1xf32>,
    return
  }
  func.func @transform_0(%arg0: i32) -> i32 {
    %c0_i32 = arith.constant 0 : i32
    %c0_i32_0 = arith.constant 0 : i32
    return %c0_i32 : i32
  }
  func.func @transform_1(%arg0: i32) -> (i32, i32) {
    %c0_i32 = arith.constant 0 : i32
    %c0_i32_0 = arith.constant 0 : i32
    return %arg0, %c0_i32 : i32, i32
  }
  func.func @transform_2(%arg0: i32) -> (i32, i32) {
    %c0_i32 = arith.constant 0 : i32
    %c0_i32_0 = arith.constant 0 : i32
    %c0_i32_1 = arith.constant 0 : i32
    return %c0_i32, %c0_i32_0 : i32, i32
  }
  func.func @transform_3(%arg0: i32) -> (i32, i32) {
    %c0_i32 = arith.constant 0 : i32
    %c0_i32_0 = arith.constant 0 : i32
    %c0_i32_1 = arith.constant 0 : i32
    return %c0_i32, %c0_i32_0 : i32, i32
  }
  func.func @transform_4(%arg0: i32) -> (i32, i32) {
    %c0_i32 = arith.constant 0 : i32
    %c0_i32_0 = arith.constant 0 : i32
    return %arg0, %c0_i32 : i32, i32
  }
}

module attributes {stable_mosaic.version = 11 : i64} {
  func.func @_triplet_kernel(%arg0: i32, %arg1: memref<8x32xf32, #tpu.memory_space<vmem>>, %arg2: memref<8x32xf32, #tpu.memory_space<vmem>>, %arg3: memref<8x32xf32, #tpu.memory_space<vmem>>, %arg4: memref<1x1xf32, #tpu.memory_space<vmem>>) attributes {dimension_semantics = [#tpu.dimension_semantics<arbitrary>], iteration_bounds = array<i64: 1>, scalar_prefetch = 0 : i64, scratch_operands = 0 : i64, tpu.core_type = #tpu.core_type<tc>, window_params = [{transform_indices = @transform_0, window_bounds = array<i64: 8, 32>}, {transform_indices = @transform_1, window_bounds = array<i64: 8, 32>}, {transform_indices = @transform_2, window_bounds = array<i64: 8, 32>}, {pipeline_mode = #tpu.pipeline_mode<synchronous>, transform_indices = @transform_3, window_bounds = array<i64: 1, 1>}]} {
    %c0_i32 = arith.constant 0 : i32
    %0 = arith.cmpi eq, %arg0, %c0_i32 : i32
    %1 = arith.extui %0 : i1 to i32
    %c0_i32_0 = arith.constant 0 : i32
    %2 = arith.cmpi ne, %1, %c0_i32_0 : i32
    scf.if %2 {
      %cst_19 = arith.constant 0.000000e+00 : f32
      %42 = vector.broadcast %cst_19 : f32 to vector<1x1xf32>
      %c0_20 = arith.constant 0 : index
      %c0_21 = arith.constant 0 : index
      %43 = vector.load %arg4[%c0_20, %c0_21] : memref<1x1xf32, #tpu.memory_space<vmem>>, vector<1x1xf32>
      tpu.vector_store %arg4[%c0_20, %c0_21], %42 {strides = array<i32>} : memref<1x1xf32, #tpu.memory_space<vmem>>, vector<1x1xf32>,
    } else {
    }
    %c0 = arith.constant 0 : index
    %c0_1 = arith.constant 0 : index
    %3 = vector.load %arg1[%c0, %c0_1] : memref<8x32xf32, #tpu.memory_space<vmem>>, vector<8x32xf32>
    %c0_2 = arith.constant 0 : index
    %c0_3 = arith.constant 0 : index
    %4 = vector.load %arg2[%c0_2, %c0_3] : memref<8x32xf32, #tpu.memory_space<vmem>>, vector<8x32xf32>
    %c0_4 = arith.constant 0 : index
    %c0_5 = arith.constant 0 : index
    %5 = vector.load %arg3[%c0_4, %c0_5] : memref<8x32xf32, #tpu.memory_space<vmem>>, vector<8x32xf32>
    %6 = arith.subf %3, %4 : vector<8x32xf32>
    %cst = arith.constant 9.99999997E-7 : f32
    %7 = vector.broadcast %cst : f32 to vector<8x32xf32>
    %8 = arith.addf %6, %7 : vector<8x32xf32>
    %9 = arith.subf %3, %5 : vector<8x32xf32>
    %cst_6 = arith.constant 9.99999997E-7 : f32
    %10 = vector.broadcast %cst_6 : f32 to vector<8x32xf32>
    %11 = arith.addf %9, %10 : vector<8x32xf32>
    %12 = arith.mulf %8, %8 : vector<8x32xf32>
    %cst_7 = arith.constant dense<0.000000e+00> : vector<8xf32>
    %13 = vector.multi_reduction <add>, %12, %cst_7 [1] : vector<8x32xf32> to vector<8xf32>
    %14 = vector.shape_cast %13 : vector<8xf32> to vector<8x1xf32>
    %15 = math.sqrt %14 : vector<8x1xf32>
    %16 = arith.mulf %11, %11 : vector<8x32xf32>
    %cst_8 = arith.constant dense<0.000000e+00> : vector<8xf32>
    %17 = vector.multi_reduction <add>, %16, %cst_8 [1] : vector<8x32xf32> to vector<8xf32>
    %18 = vector.shape_cast %17 : vector<8xf32> to vector<8x1xf32>
    %19 = math.sqrt %18 : vector<8x1xf32>
    %20 = arith.subf %15, %19 : vector<8x1xf32>
    %cst_9 = arith.constant 2.000000e+00 : f32
    %21 = vector.broadcast %cst_9 : f32 to vector<8x1xf32>
    %22 = arith.addf %20, %21 : vector<8x1xf32>
    %cst_10 = arith.constant 0.000000e+00 : f32
    %23 = vector.broadcast %cst_10 : f32 to vector<8x1xf32>
    %24 = arith.maximumf %22, %23 : vector<8x1xf32>
    %c8_i32 = arith.constant 8 : i32
    %25 = arith.muli %arg0, %c8_i32 : i32
    %26 = tpu.iota {dimensions = array<i32: 0>} : vector<8x1xi32>
    %27 = vector.broadcast %25 : i32 to vector<8x1xi32>
    %28 = arith.addi %27, %26 : vector<8x1xi32>
    %c8_i32_11 = arith.constant 8 : i32
    %29 = vector.broadcast %c8_i32_11 : i32 to vector<8x1xi32>
    %30 = arith.cmpi slt, %28, %29 : vector<8x1xi32>
    %cst_12 = arith.constant 0.000000e+00 : f32
    %31 = vector.broadcast %cst_12 : f32 to vector<8x1xf32>
    %32 = arith.select %30, %24, %31 : vector<8x1xi1>, vector<8x1xf32>
    %c0_13 = arith.constant 0 : index
    %c0_14 = arith.constant 0 : index
    %33 = vector.load %arg4[%c0_13, %c0_14] : memref<1x1xf32, #tpu.memory_space<vmem>>, vector<1x1xf32>
    %34 = vector.shape_cast %32 : vector<8x1xf32> to vector<1x8x1xf32>
    %cst_15 = arith.constant dense<0.000000e+00> : vector<1xf32>
    %35 = vector.multi_reduction <add>, %34, %cst_15 [1, 2] : vector<1x8x1xf32> to vector<1xf32>
    %36 = vector.shape_cast %35 : vector<1xf32> to vector<1x1x1xf32>
    %37 = vector.extract %36[0, 0, 0] : f32 from vector<1x1x1xf32>
    %cst_16 = arith.constant 1.250000e-01 : f32
    %38 = arith.mulf %37, %cst_16 : f32
    %39 = vector.broadcast %38 : f32 to vector<1x1xf32>
    %40 = arith.addf %33, %39 : vector<1x1xf32>
    %c0_17 = arith.constant 0 : index
    %c0_18 = arith.constant 0 : index
    %41 = vector.load %arg4[%c0_17, %c0_18] : memref<1x1xf32, #tpu.memory_space<vmem>>, vector<1x1xf32>
    tpu.vector_store %arg4[%c0_17, %c0_18], %40 {strides = array<i32>} : memref<1x1xf32, #tpu.memory_space<vmem>>, vector<1x1xf32>,
    return
  }
  func.func @transform_0(%arg0: i32) -> (i32, i32) {
    %c0_i32 = arith.constant 0 : i32
    %c0_i32_0 = arith.constant 0 : i32
    return %arg0, %c0_i32 : i32, i32
  }
  func.func @transform_1(%arg0: i32) -> (i32, i32) {
    %c0_i32 = arith.constant 0 : i32
    %c0_i32_0 = arith.constant 0 : i32
    return %arg0, %c0_i32 : i32, i32
  }
  func.func @transform_2(%arg0: i32) -> (i32, i32) {
    %c0_i32 = arith.constant 0 : i32
    %c0_i32_0 = arith.constant 0 : i32
    return %arg0, %c0_i32 : i32, i32
  }
  func.func @transform_3(%arg0: i32) -> (i32, i32) {
    %c0_i32 = arith.constant 0 : i32
    %c0_i32_0 = arith.constant 0 : i32
    %c0_i32_1 = arith.constant 0 : i32
    return %c0_i32, %c0_i32_0 : i32, i32
  }
}

</mosaic_0001>

<llo_original>
// kernel: my_loss_imp.6
$region0: #{my_loss_imp.6}
  #allocation0 [shape = 'u32[]', space=smem, size = 0x4, offset = 0x4, fixed_abs, tag = 'smem constant byte address 0x4 - core index']
  #allocation1 [shape = 'u32[144,128]{1,0:T(1,128)}', space=vmem, size = 0x12000, scoped, tag = 'internal scratch']
  %s0 = inlined_call_operand.vmem [shape: bf16[8,128], index: 0, kind: input, shape index: {}, may-alias: {0,1}]
  %s1 = inlined_call_operand.vmem [shape: bf16[8,128], index: 1, kind: input, shape index: {}, may-alias: {0,1}]
  %s2 = inlined_call_operand.vmem [shape: f32[1,8], index: 2, kind: input, shape index: {}]
  %s3 = inlined_call_operand.hbm [shape: f32[1,1], index: 3, kind: output, shape index: {}]
  %s4 = sld [smem:[#allocation0]]
  $region26: #{my_loss_imp.6} parent=0
    _
  %s6 = ssub.s32 1, %s4
  %s7 = scalar_select 0, %s6, %s4
  $region1: #{my_loss_imp.6} parent=0
    #allocation2 [shape = 'u8[512]{0}', space=vmem, size = 0x400, scoped, tag = 'output window, operand 0, single buffered']
    #allocation3 [shape = 's32[1]{0}', space=sflag, size = 0x4, scoped, tag = 'scoped memory for my_loss_imp.6']
    %8 = vsyncpa [#allocation3], 0
    // Predicated region
    $region2: #{my_loss_imp.6} parent=1 // pred_check
      _
    $region3: #{my_loss_imp.6} parent=1 // pred_check_branch
      %10 = sbr.rel (0) target = $region5
    $region4: #{my_loss_imp.6} parent=1 // pred_region
      _
    $region5: #{my_loss_imp.6} parent=1 // pred_fallthru
      _
    // Predicated region
    $region6: #{my_loss_imp.6} parent=1 // pred_check
      _
    $region7: #{my_loss_imp.6} parent=1 // pred_check_branch
      %12 = sbr.rel (0) target = $region9
    $region8: #{my_loss_imp.6} parent=1 // pred_region
      _
    $region9: #{my_loss_imp.6} parent=1 // pred_fallthru
      _
    // Predicated region
    $region10: #{my_loss_imp.6} parent=1 // pred_check
      _
    $region11: #{my_loss_imp.6} parent=1 // pred_check_branch
      %14 = sbr.rel (0) target = $region13
    $region12: #{my_loss_imp.6} parent=1 // pred_region
      _
    $region13: #{my_loss_imp.6} parent=1 // pred_fallthru
      _
    %p17 = scmp.eq.s32.totalorder 0, 0
    // Predicated region
    $region14: #{my_loss_imp.6} parent=1 // pred_check
      %p18 = pneg %p17
    $region15: #{my_loss_imp.6} parent=1 // pred_check_branch
      %20 = sbr.rel (%p18) target = $region17
    $region16: #{my_loss_imp.6} parent=1 // pred_region
      %vm21 = vcmask 0
      %22 = vst.msk [vmem:[#allocation2] sm:$0x1] %vm21, 0.0
    $region17: #{my_loss_imp.6} parent=1 // pred_fallthru
      _
    %v23 = vld [vmem:[%s0] sm:$0xf]
    %v24 = vld [vmem:[%s1] sm:$0xf]
    %v25 = vld [vmem:[%s2] sm:$0x1]
    %v26 = vmul.bf16 %v23, 1073758208
    %27 = vmatprep.subr.bf16.mxu0 0
    %28 = vmatpush1.bf16.xpose.msra.mxu0 %v24
    %29 = vmatprep.subr.bf16.mxu0 0
    %30 = vmatpush1.bf16.xpose.msra.mxu0 0
    %31 = vmatprep.subr.bf16.mxu0 0
    %32 = vmatpush1.bf16.xpose.msra.mxu0 0
    %33 = vmatprep.subr.bf16.mxu0 0
    %34 = vmatpush1.bf16.xpose.msra.mxu0 0
    %35 = vmatprep.subr.bf16.mxu0 0
    %36 = vmatpush1.bf16.xpose.msra.mxu0 0
    %37 = vmatprep.subr.bf16.mxu0 0
    %38 = vmatpush1.bf16.xpose.msra.mxu0 0
    %39 = vmatprep.subr.bf16.mxu0 0
    %40 = vmatpush1.bf16.xpose.msra.mxu0 0
    %41 = vmatprep.subr.bf16.mxu0 0
    %42 = vmatpush1.bf16.xpose.msra.mxu0 0
    %43 = vmatprep.subr.bf16.mxu0 0
    %44 = vmatpush1.bf16.xpose.msra.mxu0 0
    %45 = vmatprep.subr.bf16.mxu0 0
    %46 = vmatpush1.bf16.xpose.msra.mxu0 0
    %47 = vmatprep.subr.bf16.mxu0 0
    %48 = vmatpush1.bf16.xpose.msra.mxu0 0
    %49 = vmatprep.subr.bf16.mxu0 0
    %50 = vmatpush1.bf16.xpose.msra.mxu0 0
    %51 = vmatprep.subr.bf16.mxu0 0
    %52 = vmatpush1.bf16.xpose.msra.mxu0 0
    %53 = vmatprep.subr.bf16.mxu0 0
    %54 = vmatpush1.bf16.xpose.msra.mxu0 0
    %55 = vmatprep.subr.bf16.mxu0 0
    %56 = vmatpush1.bf16.xpose.msra.mxu0 0
    %57 = vmatprep.subr.bf16.mxu0 0
    %58 = vmatpush1.bf16.xpose.msra.mxu0 0
    %59 = vmatprep.mubr.bf16.mxu0 0
    %60 = vmatmul.mubr.bf16.gmra.mrb[0].mxu0 %v26
    %v61 = vpop.f32.mrb[0].mxu0
    %v62 = vadd.f32 0.0, %v61
    %v63 = vpop.f32.mrb[0].mxu0
    %v64 = vpop.f32.mrb[0].mxu0
    %v65 = vpop.f32.mrb[0].mxu0
    %66 = vdwg.mxu0
    %v67 = vunpack.c.l.bf16 %v23
    %v68 = vmul.f32 %v67, %v67
    %69 = vadd.xlane.f32.xlu0 %v68
    %v70 = vpop.xlane.xlu0 %69
    %v72 = vlaneseq
    %v73 = vshrl.u32 %v72, 7
    %v74 = vsub.s32 0, %v73
    %v75 = vrot.slane %v25, %v74
    %v77 = vadd.f32 %v70, %v75
    %v78 = vsub.f32 %v77, %v62
    %s79 = smul.u32 0, 8
    %v80 = vlaneseq
    %v81 = vshrl.u32 %v80, 7
    %v82 = vstv %s79
    %v83 = vadd.s32 %v82, %v81
    %vm84 = vcmp.lt.s32.totalorder %v83, 8
    %v85 = vsel %vm84, 1, 0
    %vm86 = vcmp.eq.s32.totalorder %v85, 1
    %v87 = vsel %vm86, %v78, 0.0
    %v88 = vld [vmem:[#allocation2] sm:$0x1]
    %vm89 = vcmask 64512
    %v90 = vsel %vm89, %v87, -inf
    %91 = vmax.xlane.f32.xlu0 %v90
    %v92 = vpop.xlane.xlu0 %91
    %v93 = vrot.slane %v92, 4
    %v94 = vmax.f32 %v92, %v93
    %v95 = vrot.slane %v94, 2
    %v96 = vmax.f32 %v94, %v95
    %v97 = vrot.slane %v96, 1
    %v98 = vmax.f32 %v96, %v97
    %s99 = vtos %v98
    %v100 = vstv %s99
    %v101 = vmax.f32 %v88, %v100
    %vm102 = vcmask 0
    %103 = vst.msk [vmem:[#allocation2] sm:$0x1] %vm102, %v101
    // Predicated region
    $region18: #{my_loss_imp.6} parent=1 // pred_check
      _
    $region19: #{my_loss_imp.6} parent=1 // pred_check_branch
      %105 = sbr.rel (0) target = $region21
    $region20: #{my_loss_imp.6} parent=1 // pred_region
      %s107 = ssub.s32 16, 16
      %108 = vsyncadd [#allocation3], %s107
      %s110 = sshll.u32 [#allocation2], 4
      %s111 = int_to_ptr.vmem [resolvable:$true] %s110
      %113 = dma.vmem_to_hbm [thread:$0]  %s111, 16, %s3, [#allocation3]
    $region21: #{my_loss_imp.6} parent=1 // pred_fallthru
      _
    // Predicated region
    $region22: #{my_loss_imp.6} parent=1 // pred_check
      _
    $region23: #{my_loss_imp.6} parent=1 // pred_check_branch
      %115 = sbr.rel (0) target = $region25
    $region24: #{my_loss_imp.6} parent=1 // pred_region
      %116 = dma.done [#allocation3], 16
    $region25: #{my_loss_imp.6} parent=1 // pred_fallthru
      _
    %117 = vsyncpa [#allocation3], 1

// kernel: my_loss_imp.7
$region0: #{my_loss_imp.7}
  #allocation0 [shape = 'u32[]', space=smem, size = 0x4, offset = 0x4, fixed_abs, tag = 'smem constant byte address 0x4 - core index']
  #allocation1 [shape = 'u32[144,128]{1,0:T(1,128)}', space=vmem, size = 0x12000, scoped, tag = 'internal scratch']
  %s0 = inlined_call_operand.vmem [shape: f32[2], index: 0, kind: input, shape index: {}]
  %s1 = inlined_call_operand.vmem [shape: bf16[8,128], index: 1, kind: input, shape index: {}, may-alias: {1,2}]
  %s2 = inlined_call_operand.vmem [shape: bf16[8,128], index: 2, kind: input, shape index: {}, may-alias: {1,2}]
  %s3 = inlined_call_operand.vmem [shape: f32[1,8], index: 3, kind: input, shape index: {}]
  %s4 = inlined_call_operand.vmem [shape: f32[8,1], index: 4, kind: output, shape index: {}]
  %s5 = sld [smem:[#allocation0]]
  $region30: #{my_loss_imp.7} parent=0
    _
  %s7 = ssub.s32 1, %s5
  %s8 = scalar_select 0, %s7, %s5
  $region1: #{my_loss_imp.7} parent=0
    #allocation2 [shape = 'u8[512]{0}', space=smem, size = 0x200, scoped, tag = 'input window, operand 0, single buffered']
    #allocation3 [shape = 's32[1]{0}', space=sflag, size = 0x4, scoped, tag = 'scoped memory for my_loss_imp.7']
    %9 = vsyncpa [#allocation3], 0
    // Predicated region
    $region2: #{my_loss_imp.7} parent=1 // pred_check
      _
    $region3: #{my_loss_imp.7} parent=1 // pred_check_branch
      %11 = sbr.rel (0) target = $region5
    $region4: #{my_loss_imp.7} parent=1 // pred_region
      %s13 = ssub.s32 16, 16
      %14 = vsyncadd [#allocation3], %s13
      %s16 = sshll.u32 %s0, 4
      %s17 = int_to_ptr.vmem [resolvable:$true] %s16
      %19 = dma.vmem_to_smem %s17, 16, [#allocation2], [#allocation3]
    $region5: #{my_loss_imp.7} parent=1 // pred_fallthru
      _
    // Predicated region
    $region6: #{my_loss_imp.7} parent=1 // pred_check
      _
    $region7: #{my_loss_imp.7} parent=1 // pred_check_branch
      %21 = sbr.rel (0) target = $region9
    $region8: #{my_loss_imp.7} parent=1 // pred_region
      _
    $region9: #{my_loss_imp.7} parent=1 // pred_fallthru
      _
    // Predicated region
    $region10: #{my_loss_imp.7} parent=1 // pred_check
      _
    $region11: #{my_loss_imp.7} parent=1 // pred_check_branch
      %23 = sbr.rel (0) target = $region13
    $region12: #{my_loss_imp.7} parent=1 // pred_region
      _
    $region13: #{my_loss_imp.7} parent=1 // pred_fallthru
      _
    // Predicated region
    $region14: #{my_loss_imp.7} parent=1 // pred_check
      _
    $region15: #{my_loss_imp.7} parent=1 // pred_check_branch
      %25 = sbr.rel (0) target = $region17
    $region16: #{my_loss_imp.7} parent=1 // pred_region
      _
    $region17: #{my_loss_imp.7} parent=1 // pred_fallthru
      _
    // Predicated region
    $region18: #{my_loss_imp.7} parent=1 // pred_check
      _
    $region19: #{my_loss_imp.7} parent=1 // pred_check_branch
      %27 = sbr.rel (0) target = $region21
    $region20: #{my_loss_imp.7} parent=1 // pred_region
      %28 = dma.done [#allocation3], 16
    $region21: #{my_loss_imp.7} parent=1 // pred_fallthru
      _
    %29 = sfence
    %s32 = sld [smem:[#allocation2]]
    %s33 = sld [smem:[#allocation2 + $0x1]]
    %v34 = vld [vmem:[%s1] sm:$0xf]
    %v35 = vld [vmem:[%s2] sm:$0xf]
    %v36 = vld [vmem:[%s3] sm:$0x1]
    %v37 = vmul.bf16 %v34, 1073758208
    %38 = vmatprep.subr.bf16.mxu0 0
    %39 = vmatpush1.bf16.xpose.msra.mxu0 %v35
    %40 = vmatprep.subr.bf16.mxu0 0
    %41 = vmatpush1.bf16.xpose.msra.mxu0 0
    %42 = vmatprep.subr.bf16.mxu0 0
    %43 = vmatpush1.bf16.xpose.msra.mxu0 0
    %44 = vmatprep.subr.bf16.mxu0 0
    %45 = vmatpush1.bf16.xpose.msra.mxu0 0
    %46 = vmatprep.subr.bf16.mxu0 0
    %47 = vmatpush1.bf16.xpose.msra.mxu0 0
    %48 = vmatprep.subr.bf16.mxu0 0
    %49 = vmatpush1.bf16.xpose.msra.mxu0 0
    %50 = vmatprep.subr.bf16.mxu0 0
    %51 = vmatpush1.bf16.xpose.msra.mxu0 0
    %52 = vmatprep.subr.bf16.mxu0 0
    %53 = vmatpush1.bf16.xpose.msra.mxu0 0
    %54 = vmatprep.subr.bf16.mxu0 0
    %55 = vmatpush1.bf16.xpose.msra.mxu0 0
    %56 = vmatprep.subr.bf16.mxu0 0
    %57 = vmatpush1.bf16.xpose.msra.mxu0 0
    %58 = vmatprep.subr.bf16.mxu0 0
    %59 = vmatpush1.bf16.xpose.msra.mxu0 0
    %60 = vmatprep.subr.bf16.mxu0 0
    %61 = vmatpush1.bf16.xpose.msra.mxu0 0
    %62 = vmatprep.subr.bf16.mxu0 0
    %63 = vmatpush1.bf16.xpose.msra.mxu0 0
    %64 = vmatprep.subr.bf16.mxu0 0
    %65 = vmatpush1.bf16.xpose.msra.mxu0 0
    %66 = vmatprep.subr.bf16.mxu0 0
    %67 = vmatpush1.bf16.xpose.msra.mxu0 0
    %68 = vmatprep.subr.bf16.mxu0 0
    %69 = vmatpush1.bf16.xpose.msra.mxu0 0
    %70 = vmatprep.mubr.bf16.mxu0 0
    %71 = vmatmul.mubr.bf16.gmra.mrb[0].mxu0 %v37
    %v72 = vpop.f32.mrb[0].mxu0
    %v73 = vadd.f32 0.0, %v72
    %v74 = vpop.f32.mrb[0].mxu0
    %v75 = vpop.f32.mrb[0].mxu0
    %v76 = vpop.f32.mrb[0].mxu0
    %77 = vdwg.mxu0
    %v78 = vunpack.c.l.bf16 %v34
    %v79 = vmul.f32 %v78, %v78
    %80 = vadd.xlane.f32.xlu0 %v79
    %v81 = vpop.xlane.xlu0 %80
    %v83 = vlaneseq
    %v84 = vshrl.u32 %v83, 7
    %v85 = vsub.s32 0, %v84
    %v86 = vrot.slane %v36, %v85
    %v88 = vadd.f32 %v81, %v86
    %v89 = vsub.f32 %v88, %v73
    %v90 = vmax.f32 %v89, 1e-12
    %v91 = vstv %s32
    %v92 = vmul.f32 %v91, %v90
    %v93 = vmul.f32 %v92, 1.442695
    %v94 = vpow.pop %v93
    %vm95 = vcmask 64512
    %v96 = vsel %vm95, %v94, 0.0
    %97 = vadd.xlane.f32.xlu0 %v96
    %v98 = vpop.xlane.xlu0 %97
    %v99 = vmul.f32 %v98, 0.125
    %s100 = ssub.f32 0.0, %s33
    %v101 = vstv %s100
    %v102 = vmul.f32 %v101, %v99
    %v103 = vmul.f32 %v102, 1.442695
    %v104 = vpow.pop %v103
    %v105 = vadd.f32 %v104, 1.0
    %v106 = vrcp.pop %v105
    %v107 = vmul.f32 1.0, %v106
    %vm108 = vcmask 7168
    %109 = vst.msk [vmem:[%s4] sm:$0xff] %vm108, %v107
    // Predicated region
    $region22: #{my_loss_imp.7} parent=1 // pred_check
      _
    $region23: #{my_loss_imp.7} parent=1 // pred_check_branch
      %111 = sbr.rel (0) target = $region25
    $region24: #{my_loss_imp.7} parent=1 // pred_region
      _
    $region25: #{my_loss_imp.7} parent=1 // pred_fallthru
      _
    // Predicated region
    $region26: #{my_loss_imp.7} parent=1 // pred_check
      _
    $region27: #{my_loss_imp.7} parent=1 // pred_check_branch
      %113 = sbr.rel (0) target = $region29
    $region28: #{my_loss_imp.7} parent=1 // pred_region
      _
    $region29: #{my_loss_imp.7} parent=1 // pred_fallthru
      _
    %114 = vsyncpa [#allocation3], 1

// kernel: my_loss_imp.5
$region0: #{my_loss_imp.5}
  #allocation0 [shape = 'u32[]', space=smem, size = 0x4, offset = 0x4, fixed_abs, tag = 'smem constant byte address 0x4 - core index']
  #allocation1 [shape = 'u32[144,128]{1,0:T(1,128)}', space=vmem, size = 0x12000, scoped, tag = 'internal scratch']
  %s0 = inlined_call_operand.vmem [shape: f32[8,32], index: 0, kind: input, shape index: {}]
  %s1 = inlined_call_operand.vmem [shape: f32[8,32], index: 1, kind: input, shape index: {}]
  %s2 = inlined_call_operand.vmem [shape: f32[8,32], index: 2, kind: input, shape index: {}]
  %s3 = inlined_call_operand.hbm [shape: f32[1,1], index: 3, kind: output, shape index: {}]
  %s4 = sld [smem:[#allocation0]]
  $region26: #{my_loss_imp.5} parent=0
    _
  %s6 = ssub.s32 1, %s4
  %s7 = scalar_select 0, %s6, %s4
  $region1: #{my_loss_imp.5} parent=0
    #allocation2 [shape = 'u8[512]{0}', space=vmem, size = 0x400, scoped, tag = 'output window, operand 0, single buffered']
    #allocation3 [shape = 's32[1]{0}', space=sflag, size = 0x4, scoped, tag = 'scoped memory for my_loss_imp.5']
    %8 = vsyncpa [#allocation3], 0
    // Predicated region
    $region2: #{my_loss_imp.5} parent=1 // pred_check
      _
    $region3: #{my_loss_imp.5} parent=1 // pred_check_branch
      %10 = sbr.rel (0) target = $region5
    $region4: #{my_loss_imp.5} parent=1 // pred_region
      _
    $region5: #{my_loss_imp.5} parent=1 // pred_fallthru
      _
    // Predicated region
    $region6: #{my_loss_imp.5} parent=1 // pred_check
      _
    $region7: #{my_loss_imp.5} parent=1 // pred_check_branch
      %12 = sbr.rel (0) target = $region9
    $region8: #{my_loss_imp.5} parent=1 // pred_region
      _
    $region9: #{my_loss_imp.5} parent=1 // pred_fallthru
      _
    // Predicated region
    $region10: #{my_loss_imp.5} parent=1 // pred_check
      _
    $region11: #{my_loss_imp.5} parent=1 // pred_check_branch
      %14 = sbr.rel (0) target = $region13
    $region12: #{my_loss_imp.5} parent=1 // pred_region
      _
    $region13: #{my_loss_imp.5} parent=1 // pred_fallthru
      _
    %p15 = scmp.eq.s32.totalorder 0, 0
    // Predicated region
    $region14: #{my_loss_imp.5} parent=1 // pred_check
      %p16 = pneg %p15
    $region15: #{my_loss_imp.5} parent=1 // pred_check_branch
      %18 = sbr.rel (%p16) target = $region17
    $region16: #{my_loss_imp.5} parent=1 // pred_region
      %vm19 = vcmask 0
      %20 = vst.msk [vmem:[#allocation2] sm:$0x1] %vm19, 0.0
    $region17: #{my_loss_imp.5} parent=1 // pred_fallthru
      _
    %v21 = vld [vmem:[%s0] sm:$0xff]
    %v22 = vld [vmem:[%s1] sm:$0xff]
    %v23 = vld [vmem:[%s2] sm:$0xff]
    %v24 = vsub.f32 %v21, %v22
    %v25 = vadd.f32 %v24, 1e-06
    %v26 = vsub.f32 %v21, %v23
    %v27 = vadd.f32 %v26, 1e-06
    %v28 = vmul.f32 %v25, %v25
    %vm29 = vcmask 261120
    %v30 = vsel %vm29, %v28, 0.0
    %31 = vadd.xlane.f32.xlu0 %v30
    %v32 = vpop.xlane.xlu0 %31
    %v33 = vrsqrt.pop %v32
    %v34 = vmul.f32 %v32, %v33
    %vm35 = vcmp.eq.f32.partialorder %v32, inf
    %v36 = vsel %vm35, %v32, %v34
    %vm37 = vcmp.eq.f32.partialorder %v32, 0.0
    %v38 = vand.u32 %v32, 2147483648
    %v39 = vsel %vm37, %v38, %v36
    %v40 = vmul.f32 %v27, %v27
    %v41 = vsel %vm29, %v40, 0.0
    %42 = vadd.xlane.f32.xlu0 %v41
    %v43 = vpop.xlane.xlu0 %42
    %v44 = vrsqrt.pop %v43
    %v45 = vmul.f32 %v43, %v44
    %vm46 = vcmp.eq.f32.partialorder %v43, inf
    %v47 = vsel %vm46, %v43, %v45
    %vm48 = vcmp.eq.f32.partialorder %v43, 0.0
    %v49 = vand.u32 %v43, 2147483648
    %v50 = vsel %vm48, %v49, %v47
    %v51 = vsub.f32 %v39, %v50
    %v52 = vadd.f32 %v51, 2.0
    %v53 = vmax.f32 %v52, 0.0
    %s54 = smul.u32 0, 8
    %v55 = vlaneseq
    %v56 = vshrl.u32 %v55, 7
    %v57 = vstv %s54
    %v58 = vadd.s32 %v57, %v56
    %vm59 = vcmp.lt.s32.totalorder %v58, 8
    %v60 = vsel %vm59, %v53, 0.0
    %v61 = vld [vmem:[#allocation2] sm:$0x1]
    %vm62 = vcmask 7168
    %v63 = vsel %vm62, %v60, 0.0
    %64 = vadd.xlane.f32.xlu0 %v63
    %v65 = vpop.xlane.xlu0 %64
    %v66 = vrot.slane %v65, 4
    %v67 = vadd.f32 %v65, %v66
    %v68 = vrot.slane %v67, 2
    %v69 = vadd.f32 %v67, %v68
    %v70 = vrot.slane %v69, 1
    %v71 = vadd.f32 %v69, %v70
    %s72 = vtos %v71
    %s73 = smul.f32 %s72, 0.125
    %v74 = vstv %s73
    %v75 = vadd.f32 %v61, %v74
    %vm76 = vcmask 0
    %77 = vst.msk [vmem:[#allocation2] sm:$0x1] %vm76, %v75
    // Predicated region
    $region18: #{my_loss_imp.5} parent=1 // pred_check
      _
    $region19: #{my_loss_imp.5} parent=1 // pred_check_branch
      %79 = sbr.rel (0) target = $region21
    $region20: #{my_loss_imp.5} parent=1 // pred_region
      %s81 = ssub.s32 16, 16
      %82 = vsyncadd [#allocation3], %s81
      %s84 = sshll.u32 [#allocation2], 4
      %s85 = int_to_ptr.vmem [resolvable:$true] %s84
      %87 = dma.vmem_to_hbm [thread:$0]  %s85, 16, %s3, [#allocation3]
    $region21: #{my_loss_imp.5} parent=1 // pred_fallthru
      _
    // Predicated region
    $region22: #{my_loss_imp.5} parent=1 // pred_check
      _
    $region23: #{my_loss_imp.5} parent=1 // pred_check_branch
      %89 = sbr.rel (0) target = $region25
    $region24: #{my_loss_imp.5} parent=1 // pred_region
      %90 = dma.done [#allocation3], 16
    $region25: #{my_loss_imp.5} parent=1 // pred_fallthru
      _
    %91 = vsyncpa [#allocation3], 1

</llo_original>
